<compile_context>
chip_gen: v6e
topology: v6e:2x2x1
jax: 0.10.0
libtpu: 0.0.40
codegen_flags: <defaults>
</compile_context>

<pallas_src>
import math

import jax
import jax.numpy as jnp
from jax.experimental import pallas as pl
from jax.experimental.pallas import tpu as pltpu


# ---------------------------------------------------------------------------
# Fused selection matrix: out2d = x2d @ S  with  S[2j, j] = 0.5
# x2d row m holds image rows (2i, 2i+1) of one (n, c) slab concatenated, so
# x2d[m, 2j] = x[n, c, 2i, 2j]  -> out[n, c, i, j] = 0.5 * x[n, c, 2i, 2j].
# ---------------------------------------------------------------------------
def _selection_matrix(W, dtype=jnp.float32):
    j = jnp.arange(W // 2)
    s = jnp.zeros((2 * W, W // 2), dtype)
    return s.at[2 * j, j].set(0.5)


def downsample_v2_kernel(x_ref, s_ref, o_ref):
    # x_ref: (Bm, 2W) block of row-pairs, s_ref: (2W, W//2), o_ref: (Bm, W//2)
    o_ref[...] = jnp.dot(
        x_ref[...], s_ref[...], preferred_element_type=jnp.float32
    ).astype(o_ref.dtype)


def _pick_block_rows(M, row_bytes, target_bytes=4 << 20):
    """Batch as many row-pairs per grid step as fits a ~4 MiB input block
    (safe for v7x's 32 MiB scoped VMEM even with double-buffering)."""
    if M <= 8:
        return M
    bm = min(M, max(1, target_bytes // max(row_bytes, 1)))
    bm = max(8, (bm // 8) * 8)  # keep second-minor block dim a multiple of 8
    return bm


def downsample_v2(x):
    """x: (N, C, H, W) float32 -> (N, C, H//2, W//2) = 0.25*(LL+LH+HL+HH)."""
    N, C, H, W = x.shape
    assert H % 2 == 0 and W % 2 == 0
    M = N * C * (H // 2)   # number of output rows (row-pairs of the input)
    K = 2 * W              # two input image rows per flattened row
    Wo = W // 2

    x2d = x.reshape(M, K)                      # free row-major flatten
    s = _selection_matrix(W, x.dtype)          # (2W, W//2), loaded once

    bm = _pick_block_rows(M, K * x.dtype.itemsize)
    grid = (pl.cdiv(M, bm),)

    out2d = pl.pallas_call(
        downsample_v2_kernel,
        out_shape=jax.ShapeDtypeStruct((M, Wo), x.dtype),
        grid=grid,
        in_specs=[
            pl.BlockSpec((bm, K), lambda i: (i, 0)),
            pl.BlockSpec((K, Wo), lambda i: (0, 0)),   # constant block, no re-DMA
        ],
        out_specs=pl.BlockSpec((bm, Wo), lambda i: (i, 0)),
        compiler_params=pltpu.CompilerParams(
            dimension_semantics=("parallel",),
        ),
    )(x2d, s)

    # TODO(synk): for very small W the output minor dim (< 128 lanes) still
    # incurs masked stores; packing channels into the minor dim would fix it
    # at the cost of a non-scalable block-diagonal selection matrix.
    return out2d.reshape(N, C, H // 2, W // 2)


# ---------------------------------------------------------------------------
# Pure-JAX reference mirroring the original DWT_2D (haar) + Downsample_v2.
# ---------------------------------------------------------------------------
def _haar_dwt_matrices(H, W, dtype=jnp.float32):
    a = 1.0 / math.sqrt(2.0)

    rows = jnp.arange(H // 2)
    ml_h = jnp.zeros((H // 2, H), dtype)
    ml_h = ml_h.at[rows, 2 * rows].set(a).at[rows, 2 * rows + 1].set(a)
    mh_h = jnp.zeros((H // 2, H), dtype)
    mh_h = mh_h.at[rows, 2 * rows].set(a).at[rows, 2 * rows + 1].set(-a)

    cols = jnp.arange(W // 2)
    ml_w = jnp.zeros((W // 2, W), dtype)
    ml_w = ml_w.at[cols, 2 * cols].set(a).at[cols, 2 * cols + 1].set(a)
    mh_w = jnp.zeros((W // 2, W), dtype)
    mh_w = mh_w.at[cols, 2 * cols].set(a).at[cols, 2 * cols + 1].set(-a)

    return ml_h, mh_h, ml_w.T, mh_w.T


def _reference(x):
    N, C, H, W = x.shape
    mlh, mhh, mlwt, mhwt = _haar_dwt_matrices(H, W, x.dtype)
    hi = jax.lax.Precision.HIGHEST
    L = jnp.einsum("hk,nckw->nchw", mlh, x, precision=hi)
    Hh = jnp.einsum("hk,nckw->nchw", mhh, x, precision=hi)
    LL = jnp.einsum("nchk,kw->nchw", L, mlwt, precision=hi)
    LH = jnp.einsum("nchk,kw->nchw", L, mhwt, precision=hi)
    HL = jnp.einsum("nchk,kw->nchw", Hh, mlwt, precision=hi)
    HH = jnp.einsum("nchk,kw->nchw", Hh, mhwt, precision=hi)
    return (LL + LH + HL + HH) / 4.0


if __name__ == "__main__":
    key = jax.random.PRNGKey(0)
    x = jax.random.normal(key, (2, 4, 16, 16), dtype=jnp.float32)

    out = downsample_v2(x)
    out = jax.block_until_ready(out)

    ref = _reference(x)
    assert out.shape == (2, 4, 8, 8), out.shape
    assert jnp.allclose(out, ref, atol=1e-5, rtol=1e-5), "mismatch vs reference"

    print("KERNEL_OK")
</pallas_src>

<mosaic_0001>
module attributes {stable_mosaic.version = 11 : i64} {
  func.func @downsample_v2_kernel(%arg0: i32, %arg1: memref<64x32xf32, #tpu.memory_space<vmem>>, %arg2: memref<32x8xf32, #tpu.memory_space<vmem>>, %arg3: memref<64x8xf32, #tpu.memory_space<vmem>>) attributes {dimension_semantics = [#tpu.dimension_semantics<parallel>], iteration_bounds = array<i64: 1>, scalar_prefetch = 0 : i64, scratch_operands = 0 : i64, tpu.core_type = #tpu.core_type<tc>, window_params = [{transform_indices = @transform_0, window_bounds = array<i64: 64, 32>}, {pipeline_mode = #tpu.pipeline_mode<synchronous>, transform_indices = @transform_1, window_bounds = array<i64: 32, 8>}, {transform_indices = @transform_2, window_bounds = array<i64: 64, 8>}]} {
    %c0 = arith.constant 0 : index
    %c0_0 = arith.constant 0 : index
    %0 = vector.load %arg1[%c0, %c0_0] : memref<64x32xf32, #tpu.memory_space<vmem>>, vector<64x32xf32>
    %c0_1 = arith.constant 0 : index
    %c0_2 = arith.constant 0 : index
    %1 = vector.load %arg2[%c0_1, %c0_2] : memref<32x8xf32, #tpu.memory_space<vmem>>, vector<32x8xf32>
    %cst = arith.constant dense<0.000000e+00> : vector<64x8xf32>
    %2 = tpu.matmul %0, %1, %cst {dimension_numbers = #tpu.dot_dimension_numbers<[1], [0], [0], [1], [0, 0, 1, 1], [], []>} : vector<64x32xf32>, vector<32x8xf32>, vector<64x8xf32> -> vector<64x8xf32>
    %c0_3 = arith.constant 0 : index
    %c0_4 = arith.constant 0 : index
    %3 = vector.load %arg3[%c0_3, %c0_4] : memref<64x8xf32, #tpu.memory_space<vmem>>, vector<64x8xf32>
    tpu.vector_store %arg3[%c0_3, %c0_4], %2 {strides = array<i32>} : memref<64x8xf32, #tpu.memory_space<vmem>>, vector<64x8xf32>,
    return
  }
  func.func @transform_0(%arg0: i32) -> (i32, i32) {
    %c0_i32 = arith.constant 0 : i32
    %c0_i32_0 = arith.constant 0 : i32
    return %arg0, %c0_i32 : i32, i32
  }
  func.func @transform_1(%arg0: i32) -> (i32, i32) {
    %c0_i32 = arith.constant 0 : i32
    %c0_i32_0 = arith.constant 0 : i32
    %c0_i32_1 = arith.constant 0 : i32
    return %c0_i32, %c0_i32_0 : i32, i32
  }
  func.func @transform_2(%arg0: i32) -> (i32, i32) {
    %c0_i32 = arith.constant 0 : i32
    %c0_i32_0 = arith.constant 0 : i32
    return %arg0, %c0_i32 : i32, i32
  }
}

</mosaic_0001>

<llo_original>
// kernel: tpu_custom_call.1
$region0: #{tpu_custom_call.1}
  #allocation0 [shape = 'u32[]', space=smem, size = 0x4, offset = 0x4, fixed_abs, tag = 'smem constant byte address 0x4 - core index']
  #allocation1 [shape = 'u32[144,128]{1,0:T(1,128)}', space=vmem, size = 0x12000, scoped, tag = 'internal scratch']
  %s0 = inlined_call_operand.vmem [shape: f32[64,32], index: 0, kind: input, shape index: {}]
  %s1 = inlined_call_operand.vmem [shape: f32[32,8], index: 1, kind: input, shape index: {}]
  %s2 = inlined_call_operand.vmem [shape: f32[64,8], index: 2, kind: output, shape index: {}]
  %s3 = sld [smem:[#allocation0]]
  $region18: #{tpu_custom_call.1} parent=0
    _
  %s5 = ssub.s32 1, %s3
  %s6 = scalar_select 0, %s5, %s3
  // Predicated region
  $region2: #{tpu_custom_call.1} parent=0 // pred_check
    _
  $region3: #{tpu_custom_call.1} parent=0 // pred_check_branch
    %8 = sbr.rel (0) target = $region5
  $region4: #{tpu_custom_call.1} parent=0 // pred_region
    _
  $region5: #{tpu_custom_call.1} parent=0 // pred_fallthru
    _
  // Predicated region
  $region6: #{tpu_custom_call.1} parent=0 // pred_check
    _
  $region7: #{tpu_custom_call.1} parent=0 // pred_check_branch
    %10 = sbr.rel (0) target = $region9
  $region8: #{tpu_custom_call.1} parent=0 // pred_region
    _
  $region9: #{tpu_custom_call.1} parent=0 // pred_fallthru
    _
  %v11 = vld [vmem:[%s0] sm:$0xff]
  %v12 = vld [vmem:[%s0 + $0x8] sm:$0xff]
  %v13 = vld [vmem:[%s0 + $0x10] sm:$0xff]
  %v14 = vld [vmem:[%s0 + $0x18] sm:$0xff]
  %v15 = vld [vmem:[%s0 + $0x20] sm:$0xff]
  %v16 = vld [vmem:[%s0 + $0x28] sm:$0xff]
  %v17 = vld [vmem:[%s0 + $0x30] sm:$0xff]
  %v18 = vld [vmem:[%s0 + $0x38] sm:$0xff]
  %v19 = vld [vmem:[%s1] sm:$0xff]
  %v20 = vld [vmem:[%s1 + $0x8] sm:$0xff]
  %v21 = vld [vmem:[%s1 + $0x10] sm:$0xff]
  %v22 = vld [vmem:[%s1 + $0x18] sm:$0xff]
  %vm23 = vcmask 261120
  %v25 = vsel %vm23, %v11, 0
  %v28 = vsel %vm23, %v12, 0
  %v31 = vsel %vm23, %v13, 0
  %v34 = vsel %vm23, %v14, 0
  %v37 = vsel %vm23, %v15, 0
  %v40 = vsel %vm23, %v16, 0
  %v43 = vsel %vm23, %v17, 0
  %v46 = vsel %vm23, %v18, 0
  %48 = vmatprep.subr.mxu0 0.0
  %49 = vmatpush1.msra.mxu0 0.0
  %50 = vmatprep.subr.mxu0 0.0
  %51 = vmatpush1.msra.mxu0 0.0
  %52 = vmatprep.subr.mxu0 0.0
  %53 = vmatpush1.msra.mxu0 0.0
  %54 = vmatprep.subr.mxu0 0.0
  %55 = vmatpush1.msra.mxu0 0.0
  %56 = vmatprep.subr.mxu0 0.0
  %57 = vmatpush1.msra.mxu0 0.0
  %58 = vmatprep.subr.mxu0 0.0
  %59 = vmatpush1.msra.mxu0 0.0
  %60 = vmatprep.subr.mxu0 0.0
  %61 = vmatpush1.msra.mxu0 0.0
  %62 = vmatprep.subr.mxu0 0.0
  %63 = vmatpush1.msra.mxu0 0.0
  %64 = vmatprep.subr.mxu0 0.0
  %65 = vmatpush1.msra.mxu0 0.0
  %66 = vmatprep.subr.mxu0 0.0
  %67 = vmatpush1.msra.mxu0 0.0
  %68 = vmatprep.subr.mxu0 0.0
  %69 = vmatpush1.msra.mxu0 0.0
  %70 = vmatprep.subr.mxu0 0.0
  %71 = vmatpush1.msra.mxu0 0.0
  %72 = vmatprep.subr.mxu0 0.0
  %73 = vmatpush1.msra.mxu0 %v22
  %74 = vmatprep.subr.mxu0 0.0
  %75 = vmatpush1.msra.mxu0 %v21
  %76 = vmatprep.subr.mxu0 0.0
  %77 = vmatpush1.msra.mxu0 %v20
  %78 = vmatprep.subr.mxu0 0.0
  %79 = vmatpush1.msra.mxu0 %v19
  %80 = vmatprep.subr.mxu0 0.0
  %81 = vmatpush2.msra.mxu0 0.0
  %82 = vmatprep.subr.mxu0 0.0
  %83 = vmatpush2.msra.mxu0 0.0
  %84 = vmatprep.subr.mxu0 0.0
  %85 = vmatpush2.msra.mxu0 0.0
  %86 = vmatprep.subr.mxu0 0.0
  %87 = vmatpush2.msra.mxu0 0.0
  %88 = vmatprep.subr.mxu0 0.0
  %89 = vmatpush2.msra.mxu0 0.0
  %90 = vmatprep.subr.mxu0 0.0
  %91 = vmatpush2.msra.mxu0 0.0
  %92 = vmatprep.subr.mxu0 0.0
  %93 = vmatpush2.msra.mxu0 0.0
  %94 = vmatprep.subr.mxu0 0.0
  %95 = vmatpush2.msra.mxu0 0.0
  %96 = vmatprep.subr.mxu0 0.0
  %97 = vmatpush2.msra.mxu0 0.0
  %98 = vmatprep.subr.mxu0 0.0
  %99 = vmatpush2.msra.mxu0 0.0
  %100 = vmatprep.subr.mxu0 0.0
  %101 = vmatpush2.msra.mxu0 0.0
  %102 = vmatprep.subr.mxu0 0.0
  %103 = vmatpush2.msra.mxu0 0.0
  %104 = vmatprep.subr.mxu0 0.0
  %105 = vmatpush2.msra.mxu0 0.0
  %106 = vmatprep.subr.mxu0 0.0
  %107 = vmatpush2.msra.mxu0 0.0
  %108 = vmatprep.subr.mxu0 0.0
  %109 = vmatpush2.msra.mxu0 0.0
  %110 = vmatprep.subr.mxu0 0.0
  %111 = vmatpush2.msra.mxu0 0.0
  %112 = vmatprep.mubr.f32.mxu0 0.0
  %113 = vmatmul.mubr.f32.gmra.mxu0 %v25
  %v114 = vpop.f32.mrf.mxu0
  %v115 = vadd.f32 0.0, %v114
  %v116 = vpop.f32.mrf.mxu0
  %117 = vmatprep.mubr.f32.mxu0 0.0
  %118 = vmatmul.mubr.f32.gmra.mxu0 %v28
  %v119 = vpop.f32.mrf.mxu0
  %v120 = vadd.f32 0.0, %v119
  %v121 = vpop.f32.mrf.mxu0
  %122 = vmatprep.mubr.f32.mxu0 0.0
  %123 = vmatmul.mubr.f32.gmra.mxu0 %v31
  %v124 = vpop.f32.mrf.mxu0
  %v125 = vadd.f32 0.0, %v124
  %v126 = vpop.f32.mrf.mxu0
  %127 = vmatprep.mubr.f32.mxu0 0.0
  %128 = vmatmul.mubr.f32.gmra.mxu0 %v34
  %v129 = vpop.f32.mrf.mxu0
  %v130 = vadd.f32 0.0, %v129
  %v131 = vpop.f32.mrf.mxu0
  %132 = vmatprep.mubr.f32.mxu0 0.0
  %133 = vmatmul.mubr.f32.gmra.mxu0 %v37
  %v134 = vpop.f32.mrf.mxu0
  %v135 = vadd.f32 0.0, %v134
  %v136 = vpop.f32.mrf.mxu0
  %137 = vmatprep.mubr.f32.mxu0 0.0
  %138 = vmatmul.mubr.f32.gmra.mxu0 %v40
  %v139 = vpop.f32.mrf.mxu0
  %v140 = vadd.f32 0.0, %v139
  %v141 = vpop.f32.mrf.mxu0
  %142 = vmatprep.mubr.f32.mxu0 0.0
  %143 = vmatmul.mubr.f32.gmra.mxu0 %v43
  %v144 = vpop.f32.mrf.mxu0
  %v145 = vadd.f32 0.0, %v144
  %v146 = vpop.f32.mrf.mxu0
  %147 = vmatprep.mubr.f32.mxu0 0.0
  %148 = vmatmul.mubr.f32.gmra.mxu0 %v46
  %v149 = vpop.f32.mrf.mxu0
  %v150 = vadd.f32 0.0, %v149
  %v151 = vpop.f32.mrf.mxu0
  %152 = vdwg.mxu0
  %vm153 = vcmask 64512
  %154 = vst.msk [vmem:[%s2] sm:$0xff] %vm153, %v115
  %155 = vst.msk [vmem:[%s2 + $0x8] sm:$0xff] %vm153, %v120
  %156 = vst.msk [vmem:[%s2 + $0x10] sm:$0xff] %vm153, %v125
  %157 = vst.msk [vmem:[%s2 + $0x18] sm:$0xff] %vm153, %v130
  %158 = vst.msk [vmem:[%s2 + $0x20] sm:$0xff] %vm153, %v135
  %159 = vst.msk [vmem:[%s2 + $0x28] sm:$0xff] %vm153, %v140
  %160 = vst.msk [vmem:[%s2 + $0x30] sm:$0xff] %vm153, %v145
  %161 = vst.msk [vmem:[%s2 + $0x38] sm:$0xff] %vm153, %v150
  // Predicated region
  $region10: #{tpu_custom_call.1} parent=0 // pred_check
    _
  $region11: #{tpu_custom_call.1} parent=0 // pred_check_branch
    %163 = sbr.rel (0) target = $region13
  $region12: #{tpu_custom_call.1} parent=0 // pred_region
    _
  $region13: #{tpu_custom_call.1} parent=0 // pred_fallthru
    _
  // Predicated region
  $region14: #{tpu_custom_call.1} parent=0 // pred_check
    _
  $region15: #{tpu_custom_call.1} parent=0 // pred_check_branch
    %165 = sbr.rel (0) target = $region17
  $region16: #{tpu_custom_call.1} parent=0 // pred_region
    _
  $region17: #{tpu_custom_call.1} parent=0 // pred_fallthru
    _

</llo_original>
